<compile_context>
chip_gen: v7x
topology: tpu7x:2x2x1
jax: 0.10.0
libtpu: 0.0.40
codegen_flags: <defaults>
</compile_context>

<pallas_src>
import jax
import jax.numpy as jnp
from jax.experimental import pallas as pl
from jax.experimental.pallas import tpu as pltpu


# Per-step VMEM working-set target: double-buffered inputs + output.  8 MiB
# leaves headroom under every generation's default scoped VMEM limit while
# still giving ~2 MiB output blocks (measured mem-bound copies reach ~85% of
# the HBM roofline at this block size).
_VMEM_WORKING_SET_BYTES = 8 * 1024 * 1024


def _round_up(x, m):
    return -(-x // m) * m


def _concat_kernel(*refs):
    """refs = (in_ref_0, ..., in_ref_{n-1}, out_ref); blocks are (1, C_i, TL)."""
    *in_refs, o_ref = refs
    off = 0
    for r in in_refs:
        c = r.shape[1]
        o_ref[:, off:off + c, :] = r[...]
        off += c


def _choose_lane_tile(S, chans, itemsize, batch):
    """Pick the lane-axis tile TL for the flattened (B, C, H*W) layout.

    Returns (TL, padded_working_set_bytes).  TL is a multiple of 128 (or the
    full extent S), sized so the double-buffered, sublane-padded working set
    stays within the VMEM budget, with >= 2 grid iterations when batch == 1.
    """
    sublane_q = max(8, 32 // itemsize)      # 8 rows f32, 16 bf16, 32 int8/fp8
    c_total = sum(chans)
    # VMEM bytes per lane column: all input blocks + the output block, each
    # channel extent padded to the dtype's sublane quantum, double-buffered.
    padded_rows = (sum(_round_up(c, sublane_q) for c in chans)
                   + _round_up(c_total, sublane_q))
    bytes_per_lane = 2 * padded_rows * itemsize
    tl = (_VMEM_WORKING_SET_BYTES // bytes_per_lane) // 128 * 128
    tl = max(tl, 128)                       # floor; vmem_limit_bytes covers this
    if tl >= S:
        tl = S                              # full extent: always layout-legal
        # Guarantee >= 2 parallel grid iterations for v7x megacore when the
        # batch axis does not already provide them.
        if batch == 1 and S > 128:
            tl = min(tl, _round_up(-(-S // 2), 128))
    working_set = bytes_per_lane * _round_up(tl, 128)
    return tl, working_set


def concat_pallas(xs, dimension=1):
    """torch.cat(xs, dim=1) for 4-D NCHW tensors via one Pallas kernel."""
    # TODO(synk): only channel-dim (dim=1) concat of 4-D NCHW tensors is
    # implemented here (the YOLOv8 Concat use case); other dims are not.
    assert dimension in (1, -3), "only channel-dim concat is implemented"
    B, _, H, W = xs[0].shape
    dtype = xs[0].dtype
    for x in xs:
        assert x.ndim == 4 and x.shape[0] == B and x.shape[2:] == (H, W)
        assert x.dtype == dtype
    chans = [int(x.shape[1]) for x in xs]
    c_total = sum(chans)
    itemsize = jnp.dtype(dtype).itemsize

    # Flatten the spatial dims (free contiguous reshape): channel concat is
    # independent of the (H, W) split and the flat view keeps the full spatial
    # extent contiguous on the lane axis.
    S = H * W
    tl, working_set = _choose_lane_tile(S, chans, itemsize, B)
    xs_r = [x.reshape(B, c, S) for x, c in zip(xs, chans)]

    grid = (B, pl.cdiv(S, tl))
    in_specs = [
        pl.BlockSpec((1, c, tl), lambda b, j: (b, 0, j)) for c in chans
    ]
    out_spec = pl.BlockSpec((1, c_total, tl), lambda b, j: (b, 0, j))

    # Pure copy: bytes read + bytes written.
    total_bytes = 2 * B * c_total * S * itemsize
    vmem_limit = min(max(working_set + (2 << 20), 16 << 20), 100 << 20)

    out = pl.pallas_call(
        _concat_kernel,
        out_shape=jax.ShapeDtypeStruct((B, c_total, S), dtype),
        grid_spec=pltpu.PrefetchScalarGridSpec(
            num_scalar_prefetch=0,
            grid=grid,
            in_specs=in_specs,
            out_specs=out_spec,
        ),
        compiler_params=pltpu.CompilerParams(
            dimension_semantics=("parallel", "parallel"),
            vmem_limit_bytes=vmem_limit,
        ),
        cost_estimate=pl.CostEstimate(
            flops=0, transcendentals=0, bytes_accessed=total_bytes),
    )(*xs_r)

    return out.reshape(B, c_total, H, W)


def concat_reference(xs, dimension=1):
    """Pure-JAX reference (torch.cat semantics)."""
    return jnp.concatenate(xs, axis=dimension)


if __name__ == "__main__":
    key = jax.random.PRNGKey(0)

    # Test 1: f32, batch=2, typical small YOLOv8-style channel concat.
    B, H, W = 2, 16, 16
    chans = (4, 8, 16)
    keys = jax.random.split(key, len(chans))
    xs = [
        jax.random.normal(k, (B, c, H, W), jnp.float32)
        for k, c in zip(keys, chans)
    ]
    out = jax.block_until_ready(concat_pallas(xs, dimension=1))
    ref = jax.block_until_ready(concat_reference(xs, dimension=1))
    assert out.shape == (B, sum(chans), H, W)
    assert out.dtype == ref.dtype
    assert jnp.array_equal(out, ref), "f32 mismatch vs jnp.concatenate reference"

    # Test 2: bf16, batch=1, non-128-divisible spatial (20x20) — exercises the
    # dtype-aware tiling, ragged lane tile, and the batch==1 grid split.
    B2, H2, W2 = 1, 20, 20
    chans2 = (8, 12)
    keys2 = jax.random.split(jax.random.PRNGKey(1), len(chans2))
    xs2 = [
        jax.random.normal(k, (B2, c, H2, W2), jnp.bfloat16)
        for k, c in zip(keys2, chans2)
    ]
    out2 = jax.block_until_ready(concat_pallas(xs2, dimension=1))
    ref2 = jax.block_until_ready(concat_reference(xs2, dimension=1))
    assert out2.shape == (B2, sum(chans2), H2, W2)
    assert out2.dtype == ref2.dtype
    assert jnp.array_equal(out2, ref2), "bf16 mismatch vs jnp.concatenate reference"

    print("KERNEL_OK")
</pallas_src>

<mosaic_0001>
module attributes {stable_mosaic.version = 11 : i64} {
  func.func @_concat_kernel(%arg0: i32, %arg1: i32, %arg2: memref<1x4x256xf32, #tpu.memory_space<vmem>>, %arg3: memref<1x8x256xf32, #tpu.memory_space<vmem>>, %arg4: memref<1x16x256xf32, #tpu.memory_space<vmem>>, %arg5: memref<1x28x256xf32, #tpu.memory_space<vmem>>) attributes {dimension_semantics = [#tpu.dimension_semantics<parallel>, #tpu.dimension_semantics<parallel>], iteration_bounds = array<i64: 2, 1>, scalar_prefetch = 0 : i64, scratch_operands = 0 : i64, tpu.core_type = #tpu.core_type<tc>, window_params = [{transform_indices = @transform_0, window_bounds = array<i64: 1, 4, 256>}, {transform_indices = @transform_1, window_bounds = array<i64: 1, 8, 256>}, {transform_indices = @transform_2, window_bounds = array<i64: 1, 16, 256>}, {transform_indices = @transform_3, window_bounds = array<i64: 1, 28, 256>}]} {
    %c0 = arith.constant 0 : index
    %c0_0 = arith.constant 0 : index
    %c0_1 = arith.constant 0 : index
    %0 = vector.load %arg2[%c0, %c0_0, %c0_1] : memref<1x4x256xf32, #tpu.memory_space<vmem>>, vector<1x4x256xf32>
    %c0_2 = arith.constant 0 : index
    %c0_3 = arith.constant 0 : index
    %c0_4 = arith.constant 0 : index
    %1 = vector.load %arg5[%c0_2, %c0_3, %c0_4] : memref<1x28x256xf32, #tpu.memory_space<vmem>>, vector<1x4x256xf32>
    tpu.vector_store %arg5[%c0_2, %c0_3, %c0_4], %0 {strides = array<i32>} : memref<1x28x256xf32, #tpu.memory_space<vmem>>, vector<1x4x256xf32>,
    %c0_5 = arith.constant 0 : index
    %c0_6 = arith.constant 0 : index
    %c0_7 = arith.constant 0 : index
    %2 = vector.load %arg3[%c0_5, %c0_6, %c0_7] : memref<1x8x256xf32, #tpu.memory_space<vmem>>, vector<1x8x256xf32>
    %c0_8 = arith.constant 0 : index
    %c4 = arith.constant 4 : index
    %c0_9 = arith.constant 0 : index
    %3 = vector.load %arg5[%c0_8, %c4, %c0_9] : memref<1x28x256xf32, #tpu.memory_space<vmem>>, vector<1x8x256xf32>
    tpu.vector_store %arg5[%c0_8, %c4, %c0_9], %2 {strides = array<i32>} : memref<1x28x256xf32, #tpu.memory_space<vmem>>, vector<1x8x256xf32>,
    %c0_10 = arith.constant 0 : index
    %c0_11 = arith.constant 0 : index
    %c0_12 = arith.constant 0 : index
    %4 = vector.load %arg4[%c0_10, %c0_11, %c0_12] : memref<1x16x256xf32, #tpu.memory_space<vmem>>, vector<1x16x256xf32>
    %c0_13 = arith.constant 0 : index
    %c12 = arith.constant 12 : index
    %c0_14 = arith.constant 0 : index
    %5 = vector.load %arg5[%c0_13, %c12, %c0_14] : memref<1x28x256xf32, #tpu.memory_space<vmem>>, vector<1x16x256xf32>
    tpu.vector_store %arg5[%c0_13, %c12, %c0_14], %4 {strides = array<i32>} : memref<1x28x256xf32, #tpu.memory_space<vmem>>, vector<1x16x256xf32>,
    return
  }
  func.func @transform_0(%arg0: i32, %arg1: i32) -> (i32, i32, i32) {
    %c0_i32 = arith.constant 0 : i32
    %c0_i32_0 = arith.constant 0 : i32
    return %arg0, %c0_i32, %arg1 : i32, i32, i32
  }
  func.func @transform_1(%arg0: i32, %arg1: i32) -> (i32, i32, i32) {
    %c0_i32 = arith.constant 0 : i32
    %c0_i32_0 = arith.constant 0 : i32
    return %arg0, %c0_i32, %arg1 : i32, i32, i32
  }
  func.func @transform_2(%arg0: i32, %arg1: i32) -> (i32, i32, i32) {
    %c0_i32 = arith.constant 0 : i32
    %c0_i32_0 = arith.constant 0 : i32
    return %arg0, %c0_i32, %arg1 : i32, i32, i32
  }
  func.func @transform_3(%arg0: i32, %arg1: i32) -> (i32, i32, i32) {
    %c0_i32 = arith.constant 0 : i32
    %c0_i32_0 = arith.constant 0 : i32
    return %arg0, %c0_i32, %arg1 : i32, i32, i32
  }
}

</mosaic_0001>

<llo_original>
// kernel: tpu_custom_call.1
$region0: #{tpu_custom_call.1}
  #allocation0 [shape = 'u32[]', space=smem, size = 0x4, offset = 0x4, fixed_abs, tag = 'smem constant byte address 0x4 - core index']
  #allocation1 [shape = 'u32[144,128]{1,0:T(1,128)}', space=vmem, size = 0x12000, scoped, tag = 'internal scratch']
  %s0 = inlined_call_operand.hbm [shape: f32[2,4,256], index: 0, kind: input, shape index: {}]
  %s1 = inlined_call_operand.hbm [shape: f32[2,8,256], index: 1, kind: input, shape index: {}]
  %s2 = inlined_call_operand.hbm [shape: f32[2,16,256], index: 2, kind: input, shape index: {}]
  %s3 = inlined_call_operand.vmem [shape: f32[2,28,256], index: 3, kind: output, shape index: {}]
  %s4 = sld [smem:[#allocation0]]
  $region57: #{tpu_custom_call.1} parent=0
    _
  %s6 = ssub.s32 1, %s4
  %s7 = scalar_select 0, %s6, %s4
  $region1: #{tpu_custom_call.1} parent=0
    #allocation2 [shape = 'u8[8192]{0}', space=vmem, size = 0x2000, scoped, tag = 'input window, operand 0']
    #allocation3 [shape = 's32[2]{0}', space=sflag, size = 0x8, scoped, tag = 'scoped memory for tpu_custom_call.1']
    #allocation4 [shape = 'u8[16384]{0}', space=vmem, size = 0x4000, scoped, tag = 'input window, operand 1']
    #allocation5 [shape = 's32[2]{0}', space=sflag, size = 0x8, scoped, tag = 'scoped memory for tpu_custom_call.1']
    #allocation6 [shape = 'u8[32768]{0}', space=vmem, size = 0x8000, scoped, tag = 'input window, operand 2']
    %8 = vsyncpa [#allocation3], 0
    %s9 = scalar_lea.sflag [#allocation3], 1
    %10 = vsyncpa %s9, 0
    %11 = vsyncpa [#allocation5], 0
    %s12 = scalar_lea.sflag [#allocation5], 1
    %13 = vsyncpa %s12, 0
    loop: start=0, step=1, limit=4
    $region2: #{tpu_custom_call.1} parent=1 // loop_pre_header
      _
    $region3: #{tpu_custom_call.1} parent=1 // loop_header
      %s15 = sphi 0, %s19
      %p16 = scmp.ge.s32.totalorder %s15, 4
      %s22 = sphi 0, %s34
      %s23 = sphi 0, %s30
      %s24 = sphi 0, %s22
      %s25 = sphi 0, %s23
      %s26 = sphi 0, %s24
      %s27 = sphi 0, %s25
      %s39 = sphi 0, %s41
      %s42 = sphi 0, %s39
      %s43 = sphi 0, %s42
      %s59 = sphi 0, %s43
      %s67 = sphi 0, %s69
      %s70 = sphi 0, %s67
      %s71 = sphi 0, %s70
      %s87 = sphi 0, %s71
      %s95 = sphi 0, %s97
      %s98 = sphi 0, %s95
      %s99 = sphi 0, %s98
      %s115 = sphi 0, %s99
      %s123 = sphi 0, %s125
      %s126 = sphi 0, %s123
      %s127 = sphi 0, %s126
      %s143 = sphi 0, %s127
    $region4: #{tpu_custom_call.1} parent=1 // loop_header_branch
      %18 = sbr.rel (%p16) target = $region8
    $region5: #{tpu_custom_call.1} parent=1 // loop_body
      %s20 = ssub.s32 %s15, 1
      %s21 = ssub.s32 %s15, 2
      %s28 = sadd.s32 1, %s23
      %p29 = scmp.ge.s32.totalorder %s28, 1
      %s30 = scalar_select %p29, 0, %s28
      %s31 = sadd.s32 1, %s22
      %s32 = scalar_select %p29, %s31, %s22
      %p33 = scmp.ge.s32.totalorder %s32, 2
      %s34 = scalar_select %p33, 0, %s32
      %s35 = ssub.s32 %s22, %s34
      %s36 = ssub.s32 %s23, %s30
      %s37 = sor.u32 %s35, %s36
      %p38 = scmp.eq.s32.totalorder %s37, 0
      %s40 = sadd.s32 %s39, 1
      %s41 = scalar_select %p38, %s39, %s40
      %p44 = pneg %p38
      %p45 = scmp.eq.s32.totalorder %s15, 1
      %p46 = por %p44, %p45
      %p47 = scmp.ne.s32.totalorder %s39, %s42
      %p48 = scmp.eq.s32.totalorder %s15, 0
      %p49 = por %p47, %p48
      %p50 = scmp.ne.s32.totalorder %s39, %s42
      %p51 = scmp.eq.s32.totalorder %s20, 1
      %p52 = por %p50, %p51
      %p53 = scmp.ne.s32.totalorder %s42, %s43
      %p54 = scmp.eq.s32.totalorder %s20, 0
      %p55 = por %p53, %p54
      %p56 = scmp.ne.s32.totalorder %s42, %s43
      %p57 = scmp.eq.s32.totalorder %s21, 1
      %p58 = por %p56, %p57
      %p60 = scmp.ne.s32.totalorder %s43, %s59
      %p61 = scmp.eq.s32.totalorder %s21, 0
      %p62 = por %p60, %p61
      %s63 = ssub.s32 %s22, %s34
      %s64 = ssub.s32 %s23, %s30
      %s65 = sor.u32 %s63, %s64
      %p66 = scmp.eq.s32.totalorder %s65, 0
      %s68 = sadd.s32 %s67, 1
      %s69 = scalar_select %p66, %s67, %s68
      %p72 = pneg %p66
      %p73 = scmp.eq.s32.totalorder %s15, 1
      %p74 = por %p72, %p73
      %p75 = scmp.ne.s32.totalorder %s67, %s70
      %p76 = scmp.eq.s32.totalorder %s15, 0
      %p77 = por %p75, %p76
      %p78 = scmp.ne.s32.totalorder %s67, %s70
      %p79 = scmp.eq.s32.totalorder %s20, 1
      %p80 = por %p78, %p79
      %p81 = scmp.ne.s32.totalorder %s70, %s71
      %p82 = scmp.eq.s32.totalorder %s20, 0
      %p83 = por %p81, %p82
      %p84 = scmp.ne.s32.totalorder %s70, %s71
      %p85 = scmp.eq.s32.totalorder %s21, 1
      %p86 = por %p84, %p85
      %p88 = scmp.ne.s32.totalorder %s71, %s87
      %p89 = scmp.eq.s32.totalorder %s21, 0
      %p90 = por %p88, %p89
      %s91 = ssub.s32 %s22, %s34
      %s92 = ssub.s32 %s23, %s30
      %s93 = sor.u32 %s91, %s92
      %p94 = scmp.eq.s32.totalorder %s93, 0
      %s96 = sadd.s32 %s95, 1
      %s97 = scalar_select %p94, %s95, %s96
      %p100 = pneg %p94
      %p101 = scmp.eq.s32.totalorder %s15, 1
      %p102 = por %p100, %p101
      %p103 = scmp.ne.s32.totalorder %s95, %s98
      %p104 = scmp.eq.s32.totalorder %s15, 0
      %p105 = por %p103, %p104
      %p106 = scmp.ne.s32.totalorder %s95, %s98
      %p107 = scmp.eq.s32.totalorder %s20, 1
      %p108 = por %p106, %p107
      %p109 = scmp.ne.s32.totalorder %s98, %s99
      %p110 = scmp.eq.s32.totalorder %s20, 0
      %p111 = por %p109, %p110
      %p112 = scmp.ne.s32.totalorder %s98, %s99
      %p113 = scmp.eq.s32.totalorder %s21, 1
      %p114 = por %p112, %p113
      %p116 = scmp.ne.s32.totalorder %s99, %s115
      %p117 = scmp.eq.s32.totalorder %s21, 0
      %p118 = por %p116, %p117
      %s119 = ssub.s32 %s22, %s34
      %s120 = ssub.s32 %s23, %s30
      %s121 = sor.u32 %s119, %s120
      %p122 = scmp.eq.s32.totalorder %s121, 0
      %s124 = sadd.s32 %s123, 1
      %s125 = scalar_select %p122, %s123, %s124
      %p128 = pneg %p122
      %p129 = scmp.eq.s32.totalorder %s15, 1
      %p130 = por %p128, %p129
      %p131 = scmp.ne.s32.totalorder %s123, %s126
      %p132 = scmp.eq.s32.totalorder %s15, 0
      %p133 = por %p131, %p132
      %p134 = scmp.ne.s32.totalorder %s123, %s126
      %p135 = scmp.eq.s32.totalorder %s20, 1
      %p136 = por %p134, %p135
      %p137 = scmp.ne.s32.totalorder %s126, %s127
      %p138 = scmp.eq.s32.totalorder %s20, 0
      %p139 = por %p137, %p138
      %p140 = scmp.ne.s32.totalorder %s126, %s127
      %p141 = scmp.eq.s32.totalorder %s21, 1
      %p142 = por %p140, %p141
      %p144 = scmp.ne.s32.totalorder %s127, %s143
      %p145 = scmp.eq.s32.totalorder %s21, 0
      %p146 = por %p144, %p145
      %p147 = scmp.le.s32.totalorder 1, %s15
      %p148 = scmp.lt.s32.totalorder %s15, 3
      %p149 = pnand %p147, %p148
      %p150 = pneg %p149
      // Predicated region
      $region9: #{tpu_custom_call.1} parent=5 // pred_check
        _
      $region10: #{tpu_custom_call.1} parent=5 // pred_check_branch
        %152 = sbr.rel (%p149) target = $region12
      $region11: #{tpu_custom_call.1} parent=5 // pred_region
        %s153 = ssub.s32 %s15, 1
      $region12: #{tpu_custom_call.1} parent=5 // pred_fallthru
        _
      %p154 = scmp.lt.s32.totalorder %s15, 2
      // Predicated region
      $region13: #{tpu_custom_call.1} parent=5 // pred_check
        %p155 = pneg %p154
      $region14: #{tpu_custom_call.1} parent=5 // pred_check_branch
        %157 = sbr.rel (%p155) target = $region16
      $region15: #{tpu_custom_call.1} parent=5 // pred_region
        // Predicated region
        $region17: #{tpu_custom_call.1} parent=15 // pred_check
          %p158 = pneg %p49
        $region18: #{tpu_custom_call.1} parent=15 // pred_check_branch
          %160 = sbr.rel (%p158) target = $region20
        $region19: #{tpu_custom_call.1} parent=15 // pred_region
          %s161 = sand.u32 %s39, 1
          %s162 = scalar_lea.sflag [#allocation3], %s161
          %s163 = sand.u32 %s39, 1
          %s164 = smul.addr %s163, 8
          %s165 = scalar_lea.vmem [#allocation2], %s164
          %s166 = smul.u32 2, %s23
          %s168 = ssub.s32 128, 128
          %169 = vsyncadd %s162, %s168
          %s170 = smul.addr %s22, 2
          %s171 = sadd.s32 %s166, %s170
          %s172 = smul.addr %s171, 64
          %s173 = scalar_lea.hbm %s0, %s172
          %s175 = sshll.u32 %s165, 4
          %s176 = int_to_ptr.vmem [resolvable:$true] %s175
          %178 = dma.hbm_to_vmem [thread:$0]  %s173, 128, %s176, %s162
        $region20: #{tpu_custom_call.1} parent=15 // pred_fallthru
          _
        // Predicated region
        $region21: #{tpu_custom_call.1} parent=15 // pred_check
          %p179 = pneg %p77
        $region22: #{tpu_custom_call.1} parent=15 // pred_check_branch
          %181 = sbr.rel (%p179) target = $region24
        $region23: #{tpu_custom_call.1} parent=15 // pred_region
          %s182 = sand.u32 %s15, 1
          %s183 = scalar_lea.sflag [#allocation5], %s182
          %s184 = sand.u32 %s67, 1
          %s185 = smul.addr %s184, 16
          %s186 = scalar_lea.vmem [#allocation4], %s185
          %s187 = smul.u32 2, %s23
          %s189 = ssub.s32 256, 256
          %190 = vsyncadd %s183, %s189
          %s191 = smul.addr %s22, 2
          %s192 = sadd.s32 %s187, %s191
          %s193 = smul.addr %s192, 128
          %s194 = scalar_lea.hbm %s1, %s193
          %s196 = sshll.u32 %s186, 4
          %s197 = int_to_ptr.vmem [resolvable:$true] %s196
          %199 = dma.hbm_to_vmem [thread:$0]  %s194, 256, %s197, %s183
        $region24: #{tpu_custom_call.1} parent=15 // pred_fallthru
          _
        // Predicated region
        $region25: #{tpu_custom_call.1} parent=15 // pred_check
          %p200 = pneg %p105
        $region26: #{tpu_custom_call.1} parent=15 // pred_check_branch
          %202 = sbr.rel (%p200) target = $region28
        $region27: #{tpu_custom_call.1} parent=15 // pred_region
          %s203 = sand.u32 %s15, 1
          %s204 = scalar_lea.sflag [#allocation5], %s203
          %s205 = sand.u32 %s95, 1
          %s206 = smul.addr %s205, 32
          %s207 = scalar_lea.vmem [#allocation6], %s206
          %s208 = smul.u32 2, %s23
          %s210 = ssub.s32 512, 512
          %211 = vsyncadd %s204, %s210
          %s212 = smul.addr %s22, 4
          %s213 = sadd.s32 %s208, %s212
          %s214 = smul.addr %s213, 128
          %s215 = scalar_lea.hbm %s2, %s214
          %s216 = sshll.u32 %s207, 4
          %s217 = int_to_ptr.vmem [resolvable:$true] %s216
          %222 = dma.hbm_to_vmem [thread:$0]  %s215, 512, %s217, %s204, 256, 256, 16
        $region28: #{tpu_custom_call.1} parent=15 // pred_fallthru
          _
      $region16: #{tpu_custom_call.1} parent=5 // pred_fallthru
        _
      %p223 = scmp.le.s32.totalorder 1, %s15
      %p224 = scmp.lt.s32.totalorder %s15, 3
      %p225 = pnand %p223, %p224
      %p226 = pneg %p225
      // Predicated region
      $region29: #{tpu_custom_call.1} parent=5 // pred_check
        _
      $region30: #{tpu_custom_call.1} parent=5 // pred_check_branch
        %228 = sbr.rel (%p225) target = $region32
      $region31: #{tpu_custom_call.1} parent=5 // pred_region
        %s229 = ssub.s32 %s15, 1
        %s230 = sand.u32 %s42, 1
        %s231 = scalar_lea.sflag [#allocation3], %s230
        %s232 = sand.u32 %s42, 1
        %s233 = smul.addr %s232, 8
        %s234 = scalar_lea.vmem [#allocation2], %s233
        // Predicated region
        $region33: #{tpu_custom_call.1} parent=31 // pred_check
          %p235 = pneg %p55
        $region34: #{tpu_custom_call.1} parent=31 // pred_check_branch
          %237 = sbr.rel (%p235) target = $region36
        $region35: #{tpu_custom_call.1} parent=31 // pred_region
          %238 = dma.done %s231, 128
        $region36: #{tpu_custom_call.1} parent=31 // pred_fallthru
          _
        %s239 = sand.u32 %s20, 1
        %s240 = scalar_lea.sflag [#allocation5], %s239
        %s241 = sand.u32 %s70, 1
        %s242 = smul.addr %s241, 16
        %s243 = scalar_lea.vmem [#allocation4], %s242
        // Predicated region
        $region37: #{tpu_custom_call.1} parent=31 // pred_check
          %p244 = pneg %p83
        $region38: #{tpu_custom_call.1} parent=31 // pred_check_branch
          %246 = sbr.rel (%p244) target = $region40
        $region39: #{tpu_custom_call.1} parent=31 // pred_region
          %247 = dma.done %s240, 256
        $region40: #{tpu_custom_call.1} parent=31 // pred_fallthru
          _
        %s248 = sand.u32 %s20, 1
        %s249 = scalar_lea.sflag [#allocation5], %s248
        %s250 = sand.u32 %s98, 1
        %s251 = smul.addr %s250, 32
        %s252 = scalar_lea.vmem [#allocation6], %s251
        // Predicated region
        $region41: #{tpu_custom_call.1} parent=31 // pred_check
          %p253 = pneg %p111
        $region42: #{tpu_custom_call.1} parent=31 // pred_check_branch
          %255 = sbr.rel (%p253) target = $region44
        $region43: #{tpu_custom_call.1} parent=31 // pred_region
          %256 = dma.done %s249, 512
        $region44: #{tpu_custom_call.1} parent=31 // pred_fallthru
          _
        %s257 = sand.u32 %s42, 1
        %s258 = scalar_lea.sflag [#allocation3], %s257
        %s259 = sand.u32 %s42, 1
        %s260 = smul.addr %s259, 8
        %s261 = scalar_lea.vmem [#allocation2], %s260
        %p262 = pneg %p55
        %p263 = pneg %p52
        %s264 = sand.u32 %s20, 1
        %s265 = scalar_lea.sflag [#allocation5], %s264
        %s266 = sand.u32 %s70, 1
        %s267 = smul.addr %s266, 16
        %s268 = scalar_lea.vmem [#allocation4], %s267
        %p269 = pneg %p83
        %p270 = pneg %p80
        %s271 = sand.u32 %s20, 1
        %s272 = scalar_lea.sflag [#allocation5], %s271
        %s273 = sand.u32 %s98, 1
        %s274 = smul.addr %s273, 32
        %s275 = scalar_lea.vmem [#allocation6], %s274
        %p276 = pneg %p111
        %p277 = pneg %p108
        %p278 = pneg %p139
        %p279 = pneg %p136
        %s280 = smul.u32 2, %s25
        %p281 = scmp.lt.s32.totalorder %s24, 1
        %s282 = scalar_select %p281, %s24, 1
        %p283 = scmp.lt.s32.totalorder %s280, 1
        %s284 = scalar_select %p283, %s280, 1
        %s285 = smul.addr %s282, 8
        %s286 = sadd.s32 %s284, %s285
        %s287 = smul.addr %s286, 8
        %s288 = scalar_lea.vmem %s3, %s287
        %s289 = smul.u32 2, %s25
        %s290 = smul.u32 2, %s25
        %s291 = smul.u32 2, %s25
        %s292 = smul.u32 2, %s25
        %p293 = scmp.lt.s32.totalorder %s24, 1
        %s294 = scalar_select %p293, %s24, 1
        %p295 = scmp.lt.s32.totalorder %s292, 1
        %s296 = scalar_select %p295, %s292, 1
        %s297 = smul.addr %s294, 8
        %s298 = sadd.s32 %s296, %s297
        %s299 = smul.addr %s298, 8
        %s300 = scalar_lea.vmem %s3, %s299
        %s301 = smul.u32 2, %s25
        %v302 = vld [vmem:[%s234] sm:$0xff]
        %v304 = vcombine.high %v302, %v302
        %306 = vst [vmem:[%s300] sm:$0xf] %v302
        %307 = vst [vmem:[%s300 + $0x8] sm:$0xf] %v304
        %v308 = vld [vmem:[%s243] sm:$0xff]
        %v309 = vld [vmem:[%s243 + $0x8] sm:$0xff]
        %v312 = vrot.slane %v308, 4
        %v313 = vrot.slane %v309, 4
        %316 = vst [vmem:[%s300] sm:$0xf0] %v312
        %317 = vst [vmem:[%s300 + $0x8] sm:$0xf0] %v313
        %318 = vst [vmem:[%s300 + $0x10] sm:$0xf] %v312
        %319 = vst [vmem:[%s300 + $0x18] sm:$0xf] %v313
        %v320 = vld [vmem:[%s252] sm:$0xff]
        %v321 = vld [vmem:[%s252 + $0x8] sm:$0xff]
        %v322 = vld [vmem:[%s252 + $0x10] sm:$0xff]
        %v323 = vld [vmem:[%s252 + $0x18] sm:$0xff]
        %vm328 = vcmask 1043456
        %v329 = vrot.slane %v320, 4
        %v330 = vrot.slane %v321, 4
        %v331 = vrot.slane %v322, 4
        %v332 = vsel %vm328, %v329, %v331
        %v333 = vrot.slane %v323, 4
        %v334 = vsel %vm328, %v330, %v333
        %341 = vst [vmem:[%s300 + $0x10] sm:$0xf0] %v329
        %342 = vst [vmem:[%s300 + $0x18] sm:$0xf0] %v330
        %343 = vst [vmem:[%s300 + $0x20] sm:$0xff] %v332
        %344 = vst [vmem:[%s300 + $0x28] sm:$0xff] %v334
        %345 = vst [vmem:[%s300 + $0x30] sm:$0xf] %v331
        %346 = vst [vmem:[%s300 + $0x38] sm:$0xf] %v333
        %s347 = smul.u32 2, %s25
        %p348 = scmp.lt.s32.totalorder %s24, 1
        %s349 = scalar_select %p348, %s24, 1
        %p350 = scmp.lt.s32.totalorder %s347, 1
        %s351 = scalar_select %p350, %s347, 1
        %s352 = smul.addr %s349, 8
        %s353 = sadd.s32 %s351, %s352
        %s354 = smul.addr %s353, 8
        %s355 = scalar_lea.vmem %s3, %s354
        // Predicated region
        $region45: #{tpu_custom_call.1} parent=31 // pred_check
          %p356 = pneg %p136
        $region46: #{tpu_custom_call.1} parent=31 // pred_check_branch
          %358 = sbr.rel (%p356) target = $region48
        $region47: #{tpu_custom_call.1} parent=31 // pred_region
          %s359 = smul.u32 2, %s25
        $region48: #{tpu_custom_call.1} parent=31 // pred_fallthru
          _
      $region32: #{tpu_custom_call.1} parent=5 // pred_fallthru
        _
      %p360 = scmp.le.s32.totalorder 2, %s15
      // Predicated region
      $region49: #{tpu_custom_call.1} parent=5 // pred_check
        %p361 = pneg %p360
      $region50: #{tpu_custom_call.1} parent=5 // pred_check_branch
        %363 = sbr.rel (%p361) target = $region52
      $region51: #{tpu_custom_call.1} parent=5 // pred_region
        %s364 = ssub.s32 %s15, 2
        // Predicated region
        $region53: #{tpu_custom_call.1} parent=51 // pred_check
          %p365 = pneg %p142
        $region54: #{tpu_custom_call.1} parent=51 // pred_check_branch
          %367 = sbr.rel (%p365) target = $region56
        $region55: #{tpu_custom_call.1} parent=51 // pred_region
          %s368 = smul.u32 2, %s27
          %p369 = scmp.lt.s32.totalorder %s26, 1
          %s370 = scalar_select %p369, %s26, 1
          %p371 = scmp.lt.s32.totalorder %s368, 1
          %s372 = scalar_select %p371, %s368, 1
          %s373 = smul.addr %s370, 8
          %s374 = sadd.s32 %s372, %s373
          %s375 = smul.addr %s374, 8
          %s376 = scalar_lea.vmem %s3, %s375
        $region56: #{tpu_custom_call.1} parent=51 // pred_fallthru
          _
      $region52: #{tpu_custom_call.1} parent=5 // pred_fallthru
        _
    $region6: #{tpu_custom_call.1} parent=1 // loop_footer
      %s19 = sadd.s32 1, %s15
    $region7: #{tpu_custom_call.1} parent=1 // loop_footer_branch
      %14 = sbr.rel target = $region3
    $region8: #{tpu_custom_call.1} parent=1 // loop_exit
      _
    %377 = vsyncpa [#allocation3], 1
    %s378 = scalar_lea.sflag [#allocation3], 1
    %379 = vsyncpa %s378, 1
    %380 = vsyncpa [#allocation5], 1
    %s381 = scalar_lea.sflag [#allocation5], 1
    %382 = vsyncpa %s381, 1

</llo_original>
